<compile_context>
chip_gen: v7x
topology: tpu7x:2x2x1
jax: 0.10.0
libtpu: 0.0.40
codegen_flags: <defaults>
</compile_context>

<pallas_src>
import functools
import math

import jax
import jax.numpy as jnp
import numpy as np
from jax.experimental import pallas as pl
from jax.experimental.pallas import tpu as pltpu

D_KEYS = 16  # fixed in the PyTorch module


# --------------------------- generation-aware VMEM -------------------------- #

@functools.lru_cache(maxsize=None)
def _vmem_budget_bytes():
    """~3/4 of physical VMEM, capped at 96 MiB. Falls back to 48 MiB when the
    hardware query is unavailable (safe on all generations)."""
    cap = 64 * 1024 * 1024
    try:
        get_info = getattr(pltpu, "get_tpu_info", None)
        if get_info is not None:
            cap = int(get_info().vmem_capacity_bytes)
    except Exception:
        pass
    return min((cap * 3) // 4, 96 * 1024 * 1024)


def _big_vmem():
    return _vmem_budget_bytes() >= 64 * 1024 * 1024


def _pick_tile(dim, preferred, multiple):
    """Largest tile <= preferred that divides `dim` and is a multiple of
    `multiple`; falls back to the full dim (block == array dim is layout-legal)."""
    if dim <= preferred:
        return dim
    t = (preferred // multiple) * multiple
    while t >= multiple:
        if dim % t == 0:
            return t
        t -= multiple
    return dim


# ------------------------------- tiled linear ------------------------------- #

def _linear_kernel(x_ref, w_ref, b_ref, o_ref, acc_ref):
    k = pl.program_id(2)

    @pl.when(k == 0)
    def _():
        acc_ref[...] = jnp.zeros_like(acc_ref)

    # bf16 x bf16 -> f32 accumulation on the MXU.
    acc_ref[...] += jnp.dot(x_ref[...], w_ref[...],
                            preferred_element_type=jnp.float32)

    @pl.when(k == pl.num_programs(2) - 1)
    def _():
        o_ref[...] = (acc_ref[...] + b_ref[...].astype(jnp.float32)).astype(o_ref.dtype)


def pallas_linear(x2d, w_kn, b_n, *, out_dtype=None, tm=256, tn=None, tk=None):
    """y = x2d @ w_kn + b_n   (x2d: (M,K) bf16, w_kn: (K,N) bf16, b_n: (N,) f32)."""
    M, K = x2d.shape
    N = w_kn.shape[1]
    out_dtype = x2d.dtype if out_dtype is None else out_dtype
    big = _big_vmem()
    if tn is None:
        tn = 1024 if big else 512
    if tk is None:
        tk = 1024 if big else 512
    tm = _pick_tile(M, tm, 8)      # sublane dim
    tn = _pick_tile(N, tn, 128)    # lane dim
    tk = _pick_tile(K, tk, 128)    # lane dim of x / sublane dim of w
    b2d = b_n.reshape(1, N)
    itemsize = jnp.dtype(x2d.dtype).itemsize
    cost = pl.CostEstimate(
        flops=2 * M * N * K,
        transcendentals=0,
        bytes_accessed=(M * K + K * N) * itemsize
        + (M * N) * jnp.dtype(out_dtype).itemsize + N * 4)

    return pl.pallas_call(
        _linear_kernel,
        out_shape=jax.ShapeDtypeStruct((M, N), out_dtype),
        grid_spec=pltpu.PrefetchScalarGridSpec(
            num_scalar_prefetch=0,
            grid=(M // tm, N // tn, K // tk),
            in_specs=[
                pl.BlockSpec((tm, tk), lambda i, j, k: (i, k)),
                pl.BlockSpec((tk, tn), lambda i, j, k: (k, j)),
                pl.BlockSpec((1, tn), lambda i, j, k: (0, j)),
            ],
            out_specs=pl.BlockSpec((tm, tn), lambda i, j, k: (i, j)),
            scratch_shapes=[pltpu.VMEM((tm, tn), jnp.float32)],
        ),
        compiler_params=pltpu.CompilerParams(
            dimension_semantics=("parallel", "parallel", "arbitrary"),
            vmem_limit_bytes=_vmem_budget_bytes()),
        cost_estimate=cost,
    )(x2d, w_kn, b2d)


# ------------------ fused attention + output projection --------------------- #

def _attn_out_kernel(q_ref, kT_ref, v_ref, wo_ref, bo_ref, o_ref, rep_ref, *,
                     n_heads):
    # q_ref  : (tl, H*E)   bf16 query tile, heads packed along lanes
    # kT_ref : (H*E, S)    bf16 keys, pre-transposed (per-head sublane slices)
    # v_ref  : (S, H*E)    bf16 values (resident, constant block index)
    # wo_ref : (H*E, d_llm) bf16 out-projection weight (resident)
    # bo_ref : (1, d_llm)  f32 out-projection bias
    # o_ref  : (tl, d_llm) lane-dense output tile
    # rep_ref: (tl, H*E)   bf16 VMEM scratch holding all heads' attn@V results
    H = n_heads
    E = q_ref.shape[-1] // H
    scale = 1.0 / math.sqrt(E)   # E=16 -> 0.25, exact in bf16

    for h in range(H):  # static loop; H is small and temporaries die per head
        lo, hi = h * E, (h + 1) * E
        qh = q_ref[:, lo:hi] * scale                 # (tl, E) bf16, Q pre-scaled
        kh = kT_ref[lo:hi, :]                        # (E, S)  bf16, sublane slice
        s = jnp.dot(qh, kh, preferred_element_type=jnp.float32)   # (tl, S) f32
        m = jnp.max(s, axis=-1, keepdims=True)
        p = jnp.exp(s - m)                           # f32 softmax numerics
        denom = jnp.sum(p, axis=-1, keepdims=True)
        r = pl.reciprocal(denom, approx=True)
        r = r * (2.0 - denom * r)                    # one Newton step -> ~f32
        attn = (p * r).astype(v_ref.dtype)           # bf16 probs for P @ V
        # dropout: identity in eval mode
        vh = v_ref[:, lo:hi]                         # (S, E) bf16
        rep_ref[:, lo:hi] = jnp.dot(
            attn, vh, preferred_element_type=jnp.float32).astype(rep_ref.dtype)

    # Single dense K = H*E output-projection matmul (fused, no HBM round trip).
    out = jnp.dot(rep_ref[...], wo_ref[...], preferred_element_type=jnp.float32)
    o_ref[...] = (out + bo_ref[...].astype(jnp.float32)).astype(o_ref.dtype)


def pallas_reprog_attention_out(q_blhe, kT_hes, v_she, wo_kn, bo_n, *,
                                n_heads, out_dtype=None, tl=None):
    B, L, HE = q_blhe.shape
    S = v_she.shape[0]
    d_llm = wo_kn.shape[1]
    out_dtype = q_blhe.dtype if out_dtype is None else out_dtype

    if tl is None:
        if _big_vmem():
            tl = 512
        else:
            tl = 128 if d_llm >= 2048 else 256   # v7x 64 MiB: smaller L tiles
    tl = _pick_tile(L, tl, 8)
    # Keep >= 2 programs so both v7x TensorCores get work.
    if B * (L // tl) < 2 and (L % 2 == 0) and ((L // 2) % 8 == 0):
        tl = L // 2

    bo2d = bo_n.reshape(1, d_llm)
    itemsize = jnp.dtype(q_blhe.dtype).itemsize
    cost = pl.CostEstimate(
        flops=4 * B * L * S * HE + 2 * B * L * HE * d_llm,
        transcendentals=B * n_heads * L * S,
        bytes_accessed=(B * L * HE + 2 * S * HE + HE * d_llm) * itemsize
        + d_llm * 4 + B * L * d_llm * jnp.dtype(out_dtype).itemsize)
    kernel = functools.partial(_attn_out_kernel, n_heads=n_heads)

    return pl.pallas_call(
        kernel,
        out_shape=jax.ShapeDtypeStruct((B, L, d_llm), out_dtype),
        grid_spec=pltpu.PrefetchScalarGridSpec(
            num_scalar_prefetch=0,
            grid=(B, L // tl),
            in_specs=[
                pl.BlockSpec((None, tl, HE), lambda b, l: (b, l, 0)),
                pl.BlockSpec((HE, S), lambda b, l: (0, 0)),       # resident
                pl.BlockSpec((S, HE), lambda b, l: (0, 0)),       # resident
                pl.BlockSpec((HE, d_llm), lambda b, l: (0, 0)),   # resident
                pl.BlockSpec((1, d_llm), lambda b, l: (0, 0)),    # resident
            ],
            out_specs=pl.BlockSpec((None, tl, d_llm), lambda b, l: (b, l, 0)),
            scratch_shapes=[pltpu.VMEM((tl, HE), q_blhe.dtype)],
        ),
        compiler_params=pltpu.CompilerParams(
            dimension_semantics=("parallel", "parallel"),
            vmem_limit_bytes=_vmem_budget_bytes()),
        cost_estimate=cost,
    )(q_blhe, kT_hes, v_she, wo_kn, bo2d)


# ------------------------------ module wrapper ------------------------------ #

def init_params(key, d_llm, n_heads, compute_dtype=jnp.bfloat16):
    """PyTorch-style nn.Linear init, but weights are stored pre-transposed as
    (in, out) and pre-cast to the MXU compute dtype (bf16); biases stay f32."""
    H, E = n_heads, D_KEYS
    dims = {
        "query": (d_llm, H * E),
        "key":   (d_llm, H * E),
        "value": (d_llm, H * E),
        "out":   (H * E, d_llm),
    }
    params = {}
    for name, (in_f, out_f) in dims.items():
        key, kw, kb = jax.random.split(key, 3)
        bound = 1.0 / math.sqrt(in_f)
        w = jax.random.uniform(kw, (in_f, out_f), jnp.float32,
                               minval=-bound, maxval=bound)
        b = jax.random.uniform(kb, (out_f,), jnp.float32,
                               minval=-bound, maxval=bound)
        params[f"{name}_w"] = w.astype(compute_dtype)
        params[f"{name}_b"] = b
    return params


def reprogramming_layer_forward(params, target_embedding, source_embedding,
                                value_embedding, n_heads):
    B, L, d_llm = target_embedding.shape
    HE = n_heads * D_KEYS
    cdt = params["query_w"].dtype   # bf16 compute dtype

    te = target_embedding.astype(cdt).reshape(B * L, d_llm)
    se = source_embedding.astype(cdt)
    ve = value_embedding.astype(cdt)

    # Projections (tiled, pipelined bf16 matmuls, f32 accumulation). Heads stay
    # packed along the lane (feature) axis; no activation transposes for Q/V.
    q = pallas_linear(te, params["query_w"], params["query_b"])          # (B*L, H*E)
    k = pallas_linear(se, params["key_w"], params["key_b"])              # (S, H*E)
    v = pallas_linear(ve, params["value_w"], params["value_b"])          # (S, H*E)

    q_blhe = q.reshape(B, L, HE)   # free reshape
    kT = k.T                        # one small (S, H*E)->(H*E, S) copy; kernel
                                    # then slices per-head keys along sublanes.

    # scores -> softmax -> value aggregation -> fused output projection,
    # per (batch, L-tile); output written lane-dense as (B, L, d_llm).
    return pallas_reprog_attention_out(
        q_blhe, kT, v, params["out_w"], params["out_b"],
        n_heads=n_heads, out_dtype=target_embedding.dtype)


# Pure-JAX reference for correctness checking (same params, f32 math).
def reference_forward(params, te, se, ve, n_heads):
    B, L, d_llm = te.shape
    S, _ = se.shape
    H, E = n_heads, D_KEYS
    qw = params["query_w"].astype(jnp.float32)
    kw = params["key_w"].astype(jnp.float32)
    vw = params["value_w"].astype(jnp.float32)
    ow = params["out_w"].astype(jnp.float32)
    q = (te.reshape(B * L, d_llm) @ qw + params["query_b"]).reshape(B, L, H, E)
    k = (se @ kw + params["key_b"]).reshape(S, H, E)
    v = (ve @ vw + params["value_b"]).reshape(S, H, E)
    scores = jnp.einsum("blhe,she->bhls", q, k)
    attn = jax.nn.softmax(scores / math.sqrt(E), axis=-1)
    rep = jnp.einsum("bhls,she->blhe", attn, v).reshape(B, L, H * E)
    return rep @ ow + params["out_b"]


if __name__ == "__main__":
    B, L, S = 2, 8, 12
    d_llm, n_heads = 32, 4

    root = jax.random.PRNGKey(0)
    kp, kt, ks, kv = jax.random.split(root, 4)
    params = init_params(kp, d_llm, n_heads)

    target_embedding = jax.random.normal(kt, (B, L, d_llm), jnp.float32)
    source_embedding = jax.random.normal(ks, (S, d_llm), jnp.float32)
    value_embedding = jax.random.normal(kv, (S, d_llm), jnp.float32)

    out = reprogramming_layer_forward(params, target_embedding,
                                      source_embedding, value_embedding,
                                      n_heads)
    out = jax.block_until_ready(out)

    ref = reference_forward(params, target_embedding, source_embedding,
                            value_embedding, n_heads)
    assert out.shape == (B, L, d_llm)
    # bf16 matmul operands (f32 accumulation) -> tolerance wider than pure f32.
    np.testing.assert_allclose(np.asarray(out, dtype=np.float32),
                               np.asarray(ref, dtype=np.float32),
                               rtol=3e-2, atol=3e-2)

    print("KERNEL_OK")
</pallas_src>

<mosaic_0001>
module attributes {stable_mosaic.version = 11 : i64} {
  func.func @_linear_kernel(%arg0: i32, %arg1: i32, %arg2: i32, %arg3: memref<16x32xbf16, #tpu.memory_space<vmem>>, %arg4: memref<32x64xbf16, #tpu.memory_space<vmem>>, %arg5: memref<1x64xf32, #tpu.memory_space<vmem>>, %arg6: memref<16x64xbf16, #tpu.memory_space<vmem>>, %arg7: memref<16x64xf32, #tpu.memory_space<vmem>>) attributes {dimension_semantics = [#tpu.dimension_semantics<parallel>, #tpu.dimension_semantics<parallel>, #tpu.dimension_semantics<arbitrary>], iteration_bounds = array<i64: 1, 1, 1>, scalar_prefetch = 0 : i64, scratch_operands = 1 : i64, tpu.core_type = #tpu.core_type<tc>, window_params = [{transform_indices = @transform_0, window_bounds = array<i64: 16, 32>}, {transform_indices = @transform_1, window_bounds = array<i64: 32, 64>}, {transform_indices = @transform_2, window_bounds = array<i64: 1, 64>}, {transform_indices = @transform_3, window_bounds = array<i64: 16, 64>}]} {
    %c0_i32 = arith.constant 0 : i32
    %0 = arith.cmpi eq, %arg2, %c0_i32 : i32
    %1 = arith.extui %0 : i1 to i32
    %c0_i32_0 = arith.constant 0 : i32
    %2 = arith.cmpi ne, %1, %c0_i32_0 : i32
    scf.if %2 {
      %cst_10 = arith.constant 0.000000e+00 : f32
      %12 = vector.broadcast %cst_10 : f32 to vector<16x64xf32>
      %c0_11 = arith.constant 0 : index
      %c0_12 = arith.constant 0 : index
      %13 = vector.load %arg7[%c0_11, %c0_12] : memref<16x64xf32, #tpu.memory_space<vmem>>, vector<16x64xf32>
      tpu.vector_store %arg7[%c0_11, %c0_12], %12 {strides = array<i32>} : memref<16x64xf32, #tpu.memory_space<vmem>>, vector<16x64xf32>,
    } else {
    }
    %c0 = arith.constant 0 : index
    %c0_1 = arith.constant 0 : index
    %3 = vector.load %arg7[%c0, %c0_1] : memref<16x64xf32, #tpu.memory_space<vmem>>, vector<16x64xf32>
    %c0_2 = arith.constant 0 : index
    %c0_3 = arith.constant 0 : index
    %4 = vector.load %arg3[%c0_2, %c0_3] : memref<16x32xbf16, #tpu.memory_space<vmem>>, vector<16x32xbf16>
    %c0_4 = arith.constant 0 : index
    %c0_5 = arith.constant 0 : index
    %5 = vector.load %arg4[%c0_4, %c0_5] : memref<32x64xbf16, #tpu.memory_space<vmem>>, vector<32x64xbf16>
    %cst = arith.constant dense<0.000000e+00> : vector<16x64xf32>
    %6 = tpu.matmul %4, %5, %cst {dimension_numbers = #tpu.dot_dimension_numbers<[1], [0], [0], [1], [0, 0, 1, 1], [], []>} : vector<16x32xbf16>, vector<32x64xbf16>, vector<16x64xf32> -> vector<16x64xf32>
    %7 = arith.addf %3, %6 : vector<16x64xf32>
    %c0_6 = arith.constant 0 : index
    %c0_7 = arith.constant 0 : index
    %8 = vector.load %arg7[%c0_6, %c0_7] : memref<16x64xf32, #tpu.memory_space<vmem>>, vector<16x64xf32>
    tpu.vector_store %arg7[%c0_6, %c0_7], %7 {strides = array<i32>} : memref<16x64xf32, #tpu.memory_space<vmem>>, vector<16x64xf32>,
    %c0_i32_8 = arith.constant 0 : i32
    %9 = arith.cmpi eq, %arg2, %c0_i32_8 : i32
    %10 = arith.extui %9 : i1 to i32
    %c0_i32_9 = arith.constant 0 : i32
    %11 = arith.cmpi ne, %10, %c0_i32_9 : i32
    scf.if %11 {
      %c0_10 = arith.constant 0 : index
      %c0_11 = arith.constant 0 : index
      %12 = vector.load %arg7[%c0_10, %c0_11] : memref<16x64xf32, #tpu.memory_space<vmem>>, vector<16x64xf32>
      %c0_12 = arith.constant 0 : index
      %c0_13 = arith.constant 0 : index
      %13 = vector.load %arg5[%c0_12, %c0_13] : memref<1x64xf32, #tpu.memory_space<vmem>>, vector<1x64xf32>
      %14 = vector.broadcast %13 : vector<1x64xf32> to vector<16x64xf32>
      %15 = arith.addf %12, %14 : vector<16x64xf32>
      %16 = arith.truncf %15 : vector<16x64xf32> to vector<16x64xbf16>
      %c0_14 = arith.constant 0 : index
      %c0_15 = arith.constant 0 : index
      %17 = vector.load %arg6[%c0_14, %c0_15] : memref<16x64xbf16, #tpu.memory_space<vmem>>, vector<16x64xbf16>
      tpu.vector_store %arg6[%c0_14, %c0_15], %16 {strides = array<i32>} : memref<16x64xbf16, #tpu.memory_space<vmem>>, vector<16x64xbf16>,
    } else {
    }
    return
  }
  func.func @transform_0(%arg0: i32, %arg1: i32, %arg2: i32) -> (i32, i32) {
    %c0_i32 = arith.constant 0 : i32
    return %arg0, %arg2 : i32, i32
  }
  func.func @transform_1(%arg0: i32, %arg1: i32, %arg2: i32) -> (i32, i32) {
    %c0_i32 = arith.constant 0 : i32
    return %arg2, %arg1 : i32, i32
  }
  func.func @transform_2(%arg0: i32, %arg1: i32, %arg2: i32) -> (i32, i32) {
    %c0_i32 = arith.constant 0 : i32
    %c0_i32_0 = arith.constant 0 : i32
    return %c0_i32, %arg1 : i32, i32
  }
  func.func @transform_3(%arg0: i32, %arg1: i32, %arg2: i32) -> (i32, i32) {
    %c0_i32 = arith.constant 0 : i32
    return %arg0, %arg1 : i32, i32
  }
}

</mosaic_0001>

<llo_original>
// kernel: tpu_custom_call.1
$region0: #{tpu_custom_call.1}
  #allocation0 [shape = 'u32[]', space=smem, size = 0x4, offset = 0x4, fixed_abs, tag = 'smem constant byte address 0x4 - core index']
  #allocation1 [shape = 'u32[144,128]{1,0:T(1,128)}', space=vmem, size = 0x12000, scoped, tag = 'internal scratch']
  #allocation2 [shape = 'f32[16,64]{1,0:T(8,128)}', space=vmem, size = 0x2000, scoped, tag = 'scratch operand']
  %s0 = inlined_call_operand.hbm [shape: bf16[16,32], index: 0, kind: input, shape index: {}]
  %s1 = inlined_call_operand.hbm [shape: bf16[32,64], index: 1, kind: input, shape index: {}]
  %s2 = inlined_call_operand.vmem [shape: f32[1,64], index: 2, kind: input, shape index: {}]
  %s3 = inlined_call_operand.hbm [shape: bf16[16,64], index: 3, kind: output, shape index: {}]
  %s4 = sld [smem:[#allocation0]]
  $region38: #{tpu_custom_call.1} parent=0
    _
  %s6 = ssub.s32 1, %s4
  %s7 = scalar_select 0, %s6, %s4
  $region1: #{tpu_custom_call.1} parent=0
    #allocation3 [shape = 'u8[4096]{0}', space=vmem, size = 0x1000, scoped, tag = 'input window, operand 0, single buffered']
    #allocation4 [shape = 's32[1]{0}', space=sflag, size = 0x4, scoped, tag = 'scoped memory for tpu_custom_call.1']
    #allocation5 [shape = 's32[1]{0}', space=sflag, size = 0x4, scoped, tag = 'scoped memory for tpu_custom_call.1']
    #allocation6 [shape = 'u8[8192]{0}', space=vmem, size = 0x2000, scoped, tag = 'input window, operand 1, single buffered']
    #allocation7 [shape = 's32[1]{0}', space=sflag, size = 0x4, scoped, tag = 'scoped memory for tpu_custom_call.1']
    #allocation8 [shape = 'u8[4096]{0}', space=vmem, size = 0x1000, scoped, tag = 'output window, operand 0, single buffered']
    %8 = vsyncpa [#allocation4], 0
    %9 = vsyncpa [#allocation7], 0
    %10 = vsyncpa [#allocation5], 0
    // Predicated region
    $region2: #{tpu_custom_call.1} parent=1 // pred_check
      _
    $region3: #{tpu_custom_call.1} parent=1 // pred_check_branch
      %12 = sbr.rel (0) target = $region5
    $region4: #{tpu_custom_call.1} parent=1 // pred_region
      %s14 = ssub.s32 128, 128
      %15 = vsyncadd [#allocation4], %s14
      %s16 = sshll.u32 [#allocation3], 4
      %s17 = int_to_ptr.vmem [resolvable:$true] %s16
      %22 = dma.hbm_to_vmem [thread:$0]  %s0, 128, %s17, [#allocation4], 64, 64, 4
    $region5: #{tpu_custom_call.1} parent=1 // pred_fallthru
      _
    // Predicated region
    $region6: #{tpu_custom_call.1} parent=1 // pred_check
      _
    $region7: #{tpu_custom_call.1} parent=1 // pred_check_branch
      %24 = sbr.rel (0) target = $region9
    $region8: #{tpu_custom_call.1} parent=1 // pred_region
      %s26 = ssub.s32 256, 256
      %27 = vsyncadd [#allocation7], %s26
      %s28 = sshll.u32 [#allocation6], 4
      %s29 = int_to_ptr.vmem [resolvable:$true] %s28
      %34 = dma.hbm_to_vmem [thread:$0]  %s1, 256, %s29, [#allocation7], 64, 64, 4
    $region9: #{tpu_custom_call.1} parent=1 // pred_fallthru
      _
    // Predicated region
    $region10: #{tpu_custom_call.1} parent=1 // pred_check
      _
    $region11: #{tpu_custom_call.1} parent=1 // pred_check_branch
      %36 = sbr.rel (0) target = $region13
    $region12: #{tpu_custom_call.1} parent=1 // pred_region
      _
    $region13: #{tpu_custom_call.1} parent=1 // pred_fallthru
      _
    // Predicated region
    $region14: #{tpu_custom_call.1} parent=1 // pred_check
      _
    $region15: #{tpu_custom_call.1} parent=1 // pred_check_branch
      %38 = sbr.rel (0) target = $region17
    $region16: #{tpu_custom_call.1} parent=1 // pred_region
      %39 = dma.done [#allocation4], 128
    $region17: #{tpu_custom_call.1} parent=1 // pred_fallthru
      _
    // Predicated region
    $region18: #{tpu_custom_call.1} parent=1 // pred_check
      _
    $region19: #{tpu_custom_call.1} parent=1 // pred_check_branch
      %41 = sbr.rel (0) target = $region21
    $region20: #{tpu_custom_call.1} parent=1 // pred_region
      %42 = dma.done [#allocation7], 256
    $region21: #{tpu_custom_call.1} parent=1 // pred_fallthru
      _
    %p44 = scmp.eq.s32.totalorder 0, 0
    // Predicated region
    $region22: #{tpu_custom_call.1} parent=1 // pred_check
      %p45 = pneg %p44
    $region23: #{tpu_custom_call.1} parent=1 // pred_check_branch
      %47 = sbr.rel (%p45) target = $region25
    $region24: #{tpu_custom_call.1} parent=1 // pred_region
      %vm48 = vcmask 523264
      %49 = vst.msk [vmem:[#allocation2] sm:$0xff] %vm48, 0.0
      %50 = vst.msk [vmem:[#allocation2 + $0x8] sm:$0xff] %vm48, 0.0
    $region25: #{tpu_custom_call.1} parent=1 // pred_fallthru
      _
    %v51 = vld [vmem:[#allocation2] sm:$0xff]
    %v52 = vld [vmem:[#allocation2 + $0x8] sm:$0xff]
    %v53 = vld [vmem:[#allocation3] sm:$0xf]
    %v54 = vld [vmem:[#allocation3 + $0x4] sm:$0xf]
    %v55 = vld [vmem:[#allocation6] sm:$0xf]
    %v56 = vld [vmem:[#allocation6 + $0x4] sm:$0xf]
    %v57 = vld [vmem:[#allocation6 + $0x8] sm:$0xf]
    %v58 = vld [vmem:[#allocation6 + $0xc] sm:$0xf]
    %v61 = vunpack.c.l.b16 %v53
    %v62 = vunpack.c.l.b16 %v54
    %v63 = vpack.c.b16 %v62, %v61
    %v68 = vunpack.c.l.b16 %v55
    %v69 = vunpack.c.l.b16 %v56
    %v70 = vunpack.c.l.b16 %v57
    %v71 = vunpack.c.l.b16 %v58
    %v72 = vpack.c.b16 %v69, %v68
    %v73 = vpack.c.b16 %v71, %v70
    %vm76 = vcmask 261120
    %v78 = vsel %vm76, %v63, 0
    %80 = vmatprep.subr.bf16.mxu0 0
    %81 = vmatpush1.bf16.msra.mxu0 %v72
    %82 = vmatprep.subr.bf16.mxu0 0
    %83 = vmatpush1.bf16.msra.mxu0 %v73
    %84 = vmatprep.subr.bf16.mxu0 0
    %85 = vmatpush1.bf16.msra.mxu0 0
    %86 = vmatprep.subr.bf16.mxu0 0
    %87 = vmatpush1.bf16.msra.mxu0 0
    %88 = vmatprep.subr.bf16.mxu0 0
    %89 = vmatpush1.bf16.msra.mxu0 0
    %90 = vmatprep.subr.bf16.mxu0 0
    %91 = vmatpush1.bf16.msra.mxu0 0
    %92 = vmatprep.subr.bf16.mxu0 0
    %93 = vmatpush1.bf16.msra.mxu0 0
    %94 = vmatprep.subr.bf16.mxu0 0
    %95 = vmatpush1.bf16.msra.mxu0 0
    %96 = vmatprep.subr.bf16.mxu0 0
    %97 = vmatpush1.bf16.msra.mxu0 0
    %98 = vmatprep.subr.bf16.mxu0 0
    %99 = vmatpush1.bf16.msra.mxu0 0
    %100 = vmatprep.subr.bf16.mxu0 0
    %101 = vmatpush1.bf16.msra.mxu0 0
    %102 = vmatprep.subr.bf16.mxu0 0
    %103 = vmatpush1.bf16.msra.mxu0 0
    %104 = vmatprep.subr.bf16.mxu0 0
    %105 = vmatpush1.bf16.msra.mxu0 0
    %106 = vmatprep.subr.bf16.mxu0 0
    %107 = vmatpush1.bf16.msra.mxu0 0
    %108 = vmatprep.subr.bf16.mxu0 0
    %109 = vmatpush1.bf16.msra.mxu0 0
    %110 = vmatprep.subr.bf16.mxu0 0
    %111 = vmatpush1.bf16.msra.mxu0 0
    %112 = vmatprep.mubr.bf16.mxu0 0
    %113 = vmatmul.mubr.bf16.gmra.mrb[0].mxu0 %v78
    %v114 = vpop.f32.mrb[0].mxu0
    %v115 = vadd.f32 0.0, %v114
    %v116 = vpop.f32.mrb[0].mxu0
    %v117 = vpop.f32.mrb[0].mxu0
    %v118 = vadd.f32 0.0, %v117
    %v119 = vpop.f32.mrb[0].mxu0
    %120 = vdwg.mxu0
    %v121 = vadd.f32 %v51, %v115
    %v122 = vadd.f32 %v52, %v118
    %vm123 = vcmask 523264
    %124 = vst.msk [vmem:[#allocation2] sm:$0xff] %vm123, %v121
    %125 = vst.msk [vmem:[#allocation2 + $0x8] sm:$0xff] %vm123, %v122
    // Predicated region
    $region26: #{tpu_custom_call.1} parent=1 // pred_check
      %p126 = pneg %p44
    $region27: #{tpu_custom_call.1} parent=1 // pred_check_branch
      %128 = sbr.rel (%p126) target = $region29
    $region28: #{tpu_custom_call.1} parent=1 // pred_region
      %v129 = vld [vmem:[#allocation2] sm:$0xff]
      %v130 = vld [vmem:[#allocation2 + $0x8] sm:$0xff]
      %v131 = vld [vmem:[%s2] sm:$0x1]
      %v133 = vlaneseq
      %v134 = vshrl.u32 %v133, 7
      %v135 = vsub.s32 0, %v134
      %v136 = vrot.slane %v131, %v135
      %v138 = vadd.f32 %v129, %v136
      %v139 = vadd.f32 %v130, %v136
      %v140 = vpack.c.bf16 %v139, %v138
      %v142 = vunpack.c.l.b16 %v140
      %v143 = vunpack.c.h.b16 %v140
      %v144 = vpack.c.b16 %v142, %v142
      %v145 = vpack.c.b16 %v143, %v143
      %vm148 = vcmask 519168
      %149 = vst.msk [vmem:[#allocation8] sm:$0xf] %vm148, %v144
      %150 = vst.msk [vmem:[#allocation8 + $0x4] sm:$0xf] %vm148, %v145
    $region29: #{tpu_custom_call.1} parent=1 // pred_fallthru
      _
    // Predicated region
    $region30: #{tpu_custom_call.1} parent=1 // pred_check
      _
    $region31: #{tpu_custom_call.1} parent=1 // pred_check_branch
      %152 = sbr.rel (0) target = $region33
    $region32: #{tpu_custom_call.1} parent=1 // pred_region
      %s154 = ssub.s32 128, 128
      %155 = vsyncadd [#allocation5], %s154
      %s156 = sshll.u32 [#allocation8], 4
      %s157 = int_to_ptr.vmem [resolvable:$true] %s156
      %162 = dma.vmem_to_hbm [thread:$0]  %s157, 128, %s3, [#allocation5], 64, 64, 4
    $region33: #{tpu_custom_call.1} parent=1 // pred_fallthru
      _
    // Predicated region
    $region34: #{tpu_custom_call.1} parent=1 // pred_check
      _
    $region35: #{tpu_custom_call.1} parent=1 // pred_check_branch
      %164 = sbr.rel (0) target = $region37
    $region36: #{tpu_custom_call.1} parent=1 // pred_region
      %165 = dma.done [#allocation5], 128
    $region37: #{tpu_custom_call.1} parent=1 // pred_fallthru
      _
    %166 = vsyncpa [#allocation4], 1
    %167 = vsyncpa [#allocation7], 1
    %168 = vsyncpa [#allocation5], 1

</llo_original>
